<compile_context>
chip_gen: v6e
topology: v6e:2x2x1
jax: 0.10.0
libtpu: 0.0.40
codegen_flags: <defaults>
</compile_context>

<pallas_src>
import jax
import jax.numpy as jnp
from jax.experimental import pallas as pl
from jax.experimental.pallas import tpu as pltpu


def _intensity_kernel(x_ref, noise_ref, o_ref):
    # x_ref / o_ref: (TILE_R, TILE_W) VMEM tiles.
    # noise_ref:     (TILE_R, 1) per-row multiplier, same dtype as x.
    # Lane-broadcast multiply on the VPU; compute stays in the input dtype.
    o_ref[...] = (x_ref[...] * noise_ref[...]).astype(o_ref.dtype)


def _choose_row_view(batch, feat):
    """Pick (R, L) so x can be viewed as (batch*R, L) with L a multiple of 128
    (lane-dense) and, when possible, batch*R >= 8 (sublane-dense) even for
    small batches.  Falls back to one row per batch element if C*H*W is not a
    multiple of 128."""
    for lane_w in (4096, 2048, 1024, 512, 256, 128):
        if feat % lane_w == 0 and (batch * (feat // lane_w)) >= 8:
            return feat // lane_w, lane_w
    for lane_w in (4096, 2048, 1024, 512, 256, 128):
        if feat % lane_w == 0:
            return feat // lane_w, lane_w
    return 1, feat


def intensity_forward(x, scale, key):
    """Pallas equivalent of Intensity.forward.

    x: (B, C, H, W) (NCHW, matching PyTorch)
    scale: python float
    key: jax PRNG key used for the per-batch gaussian draw
    """
    B, C, H, W = x.shape
    F = C * H * W
    itemsize = jnp.dtype(x.dtype).itemsize

    # Per-batch noise factor (glue; exact forward semantics):
    # noise = 1.0 + scale * clamp(randn(B), -2, 2)
    r = jax.random.normal(key, (B,), dtype=jnp.float32)
    noise = 1.0 + scale * jnp.clip(r, -2.0, 2.0)

    # Lane/sublane-dense 2D view of x plus per-row multipliers.
    R, Lw = _choose_row_view(B, F)
    rows = B * R
    x2d = x.reshape(rows, Lw)
    noise_rows = jnp.repeat(noise, R).reshape(rows, 1).astype(x.dtype)

    # Tile sizes: lane tile up to 4096 lanes, row tile a multiple of 8 chosen
    # so one input tile is ~2 MiB => (in + out) double-buffered ~8 MiB of VMEM,
    # comfortably under the scoped limit on v5e/v6e and v7x's 64 MiB physical.
    tile_w = min(Lw, 4096)
    target_tile_bytes = 2 * 1024 * 1024
    max_rows = max(8, (target_tile_bytes // (tile_w * itemsize)) // 8 * 8)
    tile_r = min(rows, max_rows)

    grid = (pl.cdiv(rows, tile_r), pl.cdiv(Lw, tile_w))

    out2d = pl.pallas_call(
        _intensity_kernel,
        out_shape=jax.ShapeDtypeStruct((rows, Lw), x.dtype),
        grid=grid,
        in_specs=[
            pl.BlockSpec((tile_r, tile_w), lambda i, j: (i, j)),
            pl.BlockSpec((tile_r, 1), lambda i, j: (i, 0)),
        ],
        out_specs=pl.BlockSpec((tile_r, tile_w), lambda i, j: (i, j)),
        compiler_params=pltpu.CompilerParams(
            dimension_semantics=("parallel", "parallel"),
            vmem_limit_bytes=32 * 1024 * 1024,
        ),
    )(x2d, noise_rows)

    return out2d.reshape(B, C, H, W)


if __name__ == "__main__":
    key = jax.random.PRNGKey(0)
    kx, kn = jax.random.split(key)

    B, C, H, W = 2, 4, 16, 16
    scale = 0.1

    x = jax.random.normal(kx, (B, C, H, W), dtype=jnp.float32)

    out = intensity_forward(x, scale, kn)
    out = jax.block_until_ready(out)

    # Reference check in plain JAX (same noise draw).
    r = jax.random.normal(kn, (B,), dtype=jnp.float32)
    noise = (1.0 + scale * jnp.clip(r, -2.0, 2.0)).reshape(B, 1, 1, 1)
    ref = x * noise
    assert out.shape == (B, C, H, W)
    assert jnp.allclose(out, ref, atol=1e-6, rtol=1e-6)

    print("KERNEL_OK")
</pallas_src>

<mosaic_0001>
module attributes {stable_mosaic.version = 11 : i64} {
  func.func @_intensity_kernel(%arg0: i32, %arg1: i32, %arg2: memref<8x256xf32, #tpu.memory_space<vmem>>, %arg3: memref<8x1xf32, #tpu.memory_space<vmem>>, %arg4: memref<8x256xf32, #tpu.memory_space<vmem>>) attributes {dimension_semantics = [#tpu.dimension_semantics<parallel>, #tpu.dimension_semantics<parallel>], iteration_bounds = array<i64: 1, 1>, scalar_prefetch = 0 : i64, scratch_operands = 0 : i64, tpu.core_type = #tpu.core_type<tc>, window_params = [{transform_indices = @transform_0, window_bounds = array<i64: 8, 256>}, {transform_indices = @transform_1, window_bounds = array<i64: 8, 1>}, {transform_indices = @transform_2, window_bounds = array<i64: 8, 256>}]} {
    %c0 = arith.constant 0 : index
    %c0_0 = arith.constant 0 : index
    %0 = vector.load %arg2[%c0, %c0_0] : memref<8x256xf32, #tpu.memory_space<vmem>>, vector<8x256xf32>
    %c0_1 = arith.constant 0 : index
    %c0_2 = arith.constant 0 : index
    %1 = vector.load %arg3[%c0_1, %c0_2] : memref<8x1xf32, #tpu.memory_space<vmem>>, vector<8x1xf32>
    %2 = vector.broadcast %1 : vector<8x1xf32> to vector<8x256xf32>
    %3 = arith.mulf %0, %2 : vector<8x256xf32>
    %c0_3 = arith.constant 0 : index
    %c0_4 = arith.constant 0 : index
    %4 = vector.load %arg4[%c0_3, %c0_4] : memref<8x256xf32, #tpu.memory_space<vmem>>, vector<8x256xf32>
    tpu.vector_store %arg4[%c0_3, %c0_4], %3 {strides = array<i32>} : memref<8x256xf32, #tpu.memory_space<vmem>>, vector<8x256xf32>,
    return
  }
  func.func @transform_0(%arg0: i32, %arg1: i32) -> (i32, i32) {
    %c0_i32 = arith.constant 0 : i32
    return %arg0, %arg1 : i32, i32
  }
  func.func @transform_1(%arg0: i32, %arg1: i32) -> (i32, i32) {
    %c0_i32 = arith.constant 0 : i32
    %c0_i32_0 = arith.constant 0 : i32
    return %arg0, %c0_i32 : i32, i32
  }
  func.func @transform_2(%arg0: i32, %arg1: i32) -> (i32, i32) {
    %c0_i32 = arith.constant 0 : i32
    return %arg0, %arg1 : i32, i32
  }
}

</mosaic_0001>

<llo_original>
// kernel: tpu_custom_call.1
$region0: #{tpu_custom_call.1}
  #allocation0 [shape = 'u32[]', space=smem, size = 0x4, offset = 0x4, fixed_abs, tag = 'smem constant byte address 0x4 - core index']
  #allocation1 [shape = 'u32[144,128]{1,0:T(1,128)}', space=vmem, size = 0x12000, scoped, tag = 'internal scratch']
  %s0 = inlined_call_operand.hbm [shape: f32[8,256], index: 0, kind: input, shape index: {}]
  %s1 = inlined_call_operand.vmem [shape: f32[8,1], index: 1, kind: input, shape index: {}]
  %s2 = inlined_call_operand.hbm [shape: f32[8,256], index: 2, kind: output, shape index: {}]
  %s3 = sld [smem:[#allocation0]]
  $region22: #{tpu_custom_call.1} parent=0
    _
  %s5 = ssub.s32 1, %s3
  %s6 = scalar_select 0, %s5, %s3
  $region1: #{tpu_custom_call.1} parent=0
    #allocation2 [shape = 'u8[8192]{0}', space=vmem, size = 0x2000, scoped, tag = 'input window, operand 0, single buffered']
    #allocation3 [shape = 's32[1]{0}', space=sflag, size = 0x4, scoped, tag = 'scoped memory for tpu_custom_call.1']
    #allocation4 [shape = 's32[1]{0}', space=sflag, size = 0x4, scoped, tag = 'scoped memory for tpu_custom_call.1']
    #allocation5 [shape = 'u8[8192]{0}', space=vmem, size = 0x2000, scoped, tag = 'output window, operand 0, single buffered']
    %7 = vsyncpa [#allocation3], 0
    %8 = vsyncpa [#allocation4], 0
    // Predicated region
    $region2: #{tpu_custom_call.1} parent=1 // pred_check
      _
    $region3: #{tpu_custom_call.1} parent=1 // pred_check_branch
      %10 = sbr.rel (0) target = $region5
    $region4: #{tpu_custom_call.1} parent=1 // pred_region
      %s12 = ssub.s32 256, 256
      %13 = vsyncadd [#allocation3], %s12
      %s15 = sshll.u32 [#allocation2], 4
      %s16 = int_to_ptr.vmem [resolvable:$true] %s15
      %18 = dma.hbm_to_vmem [thread:$0]  %s0, 256, %s16, [#allocation3]
    $region5: #{tpu_custom_call.1} parent=1 // pred_fallthru
      _
    // Predicated region
    $region6: #{tpu_custom_call.1} parent=1 // pred_check
      _
    $region7: #{tpu_custom_call.1} parent=1 // pred_check_branch
      %20 = sbr.rel (0) target = $region9
    $region8: #{tpu_custom_call.1} parent=1 // pred_region
      _
    $region9: #{tpu_custom_call.1} parent=1 // pred_fallthru
      _
    // Predicated region
    $region10: #{tpu_custom_call.1} parent=1 // pred_check
      _
    $region11: #{tpu_custom_call.1} parent=1 // pred_check_branch
      %22 = sbr.rel (0) target = $region13
    $region12: #{tpu_custom_call.1} parent=1 // pred_region
      %23 = dma.done [#allocation3], 256
    $region13: #{tpu_custom_call.1} parent=1 // pred_fallthru
      _
    %v24 = vld [vmem:[#allocation2] sm:$0xff]
    %v25 = vld [vmem:[#allocation2 + $0x8] sm:$0xff]
    %v26 = vld [vmem:[%s1] sm:$0xff]
    %28 = vset.pattern.permute.xlu0 0
    %29 = vperm.xlu0 %28, %v26
    %v30 = vpop.permute.xlu0 %29
    %v32 = vmul.f32 %v24, %v30
    %v33 = vmul.f32 %v25, %v30
    %34 = vst [vmem:[#allocation5] sm:$0xff] %v32
    %35 = vst [vmem:[#allocation5 + $0x8] sm:$0xff] %v33
    // Predicated region
    $region14: #{tpu_custom_call.1} parent=1 // pred_check
      _
    $region15: #{tpu_custom_call.1} parent=1 // pred_check_branch
      %37 = sbr.rel (0) target = $region17
    $region16: #{tpu_custom_call.1} parent=1 // pred_region
      %s39 = ssub.s32 256, 256
      %40 = vsyncadd [#allocation4], %s39
      %s42 = sshll.u32 [#allocation5], 4
      %s43 = int_to_ptr.vmem [resolvable:$true] %s42
      %45 = dma.vmem_to_hbm [thread:$0]  %s43, 256, %s2, [#allocation4]
    $region17: #{tpu_custom_call.1} parent=1 // pred_fallthru
      _
    // Predicated region
    $region18: #{tpu_custom_call.1} parent=1 // pred_check
      _
    $region19: #{tpu_custom_call.1} parent=1 // pred_check_branch
      %47 = sbr.rel (0) target = $region21
    $region20: #{tpu_custom_call.1} parent=1 // pred_region
      %48 = dma.done [#allocation4], 256
    $region21: #{tpu_custom_call.1} parent=1 // pred_fallthru
      _
    %49 = vsyncpa [#allocation3], 1
    %50 = vsyncpa [#allocation4], 1

</llo_original>
